<compile_context>
chip_gen: v7x
topology: tpu7x:2x2x1
jax: 0.10.0
libtpu: 0.0.40
codegen_flags: <defaults>
</compile_context>

<pallas_src>
import functools

import jax
import jax.numpy as jnp
from jax.experimental import pallas as pl
from jax.experimental.pallas import tpu as pltpu

# Buffers from EnvelopLayer.__init__ (deterministic, no checkpoint needed).
P_DEFAULT = 6
XC_DEFAULT = 5.0

_LANES = 128           # vreg lane width (last dim)
_MAX_TILE_ROWS = 2048  # 2048 x 128 x 4 B = 1 MiB f32 per block (~86% of HBM roofline)
_MIN_TILE_ROWS = 256   # multiple of 32 -> legal (8,128)/(16,128)/(32,128) tiling


def _choose_tile_rows(rows: int) -> int:
    """Largest tile <= 1 MiB f32 that still leaves >= 4 grid steps (v7x megacore)."""
    if rows <= _MIN_TILE_ROWS:
        return rows  # single block equal to the full array: always legal
    tile = _MAX_TILE_ROWS
    while tile > _MIN_TILE_ROWS and rows < 4 * tile:
        tile //= 2
    return tile


def _int_pow(x, n: int):
    """x ** n for a static positive int n, via square-and-multiply (unrolled)."""
    result = None
    base = x
    while n > 0:
        if n & 1:
            result = base if result is None else result * base
        n >>= 1
        if n:
            base = base * base
    return result


def _envelop_kernel(x_ref, o_ref, *, p: int, xc: float):
    # Upcast inside the kernel so bf16/f16 inputs stream at native width over
    # HBM while the polynomial (and the x < xc comparison) run in f32 on the VPU.
    x = x_ref[...].astype(jnp.float32)
    xn = x * jnp.float32(1.0 / xc)
    xn2 = xn * xn
    # x_norm ** p with a short square-and-multiply chain (p is static).
    if p == 1:
        x_p = xn
    elif p % 2 == 0:
        x_p = _int_pow(xn2, p // 2)
    else:
        x_p = _int_pow(xn2, p // 2) * xn
    c0 = jnp.float32((p + 1) * (p + 2) / 2.0)
    c1 = jnp.float32(p * (p + 2))
    c2 = jnp.float32(p * (p + 1) / 2.0)
    # 1 - c0*x^p + c1*x^(p+1) - c2*x^(p+2)  ==  1 - x^p * (c0 - c1*xn + c2*xn^2)
    poly = 1.0 - x_p * (c0 - c1 * xn + c2 * xn2)
    o_ref[...] = jnp.where(x < jnp.float32(xc), poly, 0.0).astype(o_ref.dtype)


@functools.partial(jax.jit, static_argnames=("p", "xc"))
def envelop_layer(distances: jnp.ndarray,
                  p: int = P_DEFAULT,
                  xc: float = XC_DEFAULT) -> jnp.ndarray:
    """Pallas implementation of EnvelopLayer.forward (elementwise envelope)."""
    orig_shape = distances.shape
    x = distances.reshape(-1)  # contiguous flatten: layout-only, no HBM pass
    n = x.shape[0]

    if n == 0:  # degenerate empty input
        return distances

    # Pad only when the element count is not lane-aligned (128). No padding /
    # slicing passes for the common aligned case.
    if n % _LANES != 0:
        pad = _LANES - n % _LANES
        # Pad value >= xc -> maps to 0 in the kernel, then sliced off anyway.
        x = jnp.concatenate(
            [x, jnp.full((pad,), xc + 1.0, dtype=x.dtype)])

    rows = x.shape[0] // _LANES
    x2d = x.reshape(rows, _LANES)

    tile_rows = _choose_tile_rows(rows)
    grid = (pl.cdiv(rows, tile_rows),)  # ragged last block is masked by Pallas

    out2d = pl.pallas_call(
        functools.partial(_envelop_kernel, p=p, xc=float(xc)),
        out_shape=jax.ShapeDtypeStruct((rows, _LANES), distances.dtype),
        grid_spec=pltpu.PrefetchScalarGridSpec(
            num_scalar_prefetch=0,
            grid=grid,
            in_specs=[pl.BlockSpec((tile_rows, _LANES), lambda i: (i, 0))],
            out_specs=pl.BlockSpec((tile_rows, _LANES), lambda i: (i, 0)),
        ),
        compiler_params=pltpu.CompilerParams(
            dimension_semantics=("parallel",)),
    )(x2d)

    out = out2d.reshape(-1)
    if out.shape[0] != n:
        out = out[:n]
    return out.reshape(orig_shape)


def _envelop_ref(x, p=P_DEFAULT, xc=XC_DEFAULT):
    """Pure-JAX reference matching the PyTorch envelop_fn semantics."""
    x = x.astype(jnp.float32)
    x_norm = x / xc
    x_p = x_norm ** p
    x_p1 = x_p * x_norm
    x_p2 = x_p1 * x_norm
    val = (1.0 - x_p * (p + 1) * (p + 2) / 2.0
           + p * (p + 2) * x_p1 - p * (p + 1) * x_p2 / 2.0)
    return jnp.where(x < xc, val, jnp.zeros_like(x))


if __name__ == "__main__":
    key = jax.random.PRNGKey(0)

    # Pairwise-distance-like input: (batch=2, n_atoms=16, n_atoms=16, channels=4)
    distances = jax.random.uniform(
        key, (2, 16, 16, 4), dtype=jnp.float32, minval=0.0, maxval=8.0)
    out = jax.block_until_ready(envelop_layer(distances))
    ref = _envelop_ref(distances)
    assert out.shape == distances.shape
    assert out.dtype == distances.dtype
    assert jnp.allclose(out, ref, atol=1e-5, rtol=1e-5), "f32 mismatch vs reference"

    # Exercise the non-lane-aligned + sub-32-bit (bf16) path: dtype is carried
    # through the kernel natively, cast to f32 only inside.
    d_bf16 = jax.random.uniform(
        jax.random.PRNGKey(1), (3, 7, 5), dtype=jnp.float32,
        minval=0.0, maxval=8.0).astype(jnp.bfloat16)
    o_bf16 = jax.block_until_ready(envelop_layer(d_bf16))
    r_bf16 = _envelop_ref(d_bf16.astype(jnp.float32))
    assert o_bf16.shape == d_bf16.shape
    assert o_bf16.dtype == jnp.bfloat16
    assert jnp.allclose(o_bf16.astype(jnp.float32), r_bf16,
                        atol=2e-2, rtol=2e-2), "bf16 mismatch vs reference"

    print("KERNEL_OK")
</pallas_src>

<mosaic_0001>
module attributes {stable_mosaic.version = 11 : i64} {
  func.func @_envelop_kernel(%arg0: i32, %arg1: memref<16x128xf32, #tpu.memory_space<vmem>>, %arg2: memref<16x128xf32, #tpu.memory_space<vmem>>) attributes {dimension_semantics = [#tpu.dimension_semantics<parallel>], iteration_bounds = array<i64: 1>, scalar_prefetch = 0 : i64, scratch_operands = 0 : i64, tpu.core_type = #tpu.core_type<tc>, window_params = [{transform_indices = @transform_0, window_bounds = array<i64: 16, 128>}, {transform_indices = @transform_1, window_bounds = array<i64: 16, 128>}]} {
    %c0 = arith.constant 0 : index
    %c0_0 = arith.constant 0 : index
    %0 = vector.load %arg1[%c0, %c0_0] : memref<16x128xf32, #tpu.memory_space<vmem>>, vector<16x128xf32>
    %cst = arith.constant 2.000000e-01 : f32
    %1 = vector.broadcast %cst : f32 to vector<16x128xf32>
    %2 = arith.mulf %0, %1 : vector<16x128xf32>
    %3 = arith.mulf %2, %2 : vector<16x128xf32>
    %4 = arith.mulf %3, %3 : vector<16x128xf32>
    %5 = arith.mulf %3, %4 : vector<16x128xf32>
    %cst_1 = arith.constant 4.800000e+01 : f32
    %6 = vector.broadcast %cst_1 : f32 to vector<16x128xf32>
    %7 = arith.mulf %6, %2 : vector<16x128xf32>
    %cst_2 = arith.constant 2.800000e+01 : f32
    %8 = vector.broadcast %cst_2 : f32 to vector<16x128xf32>
    %9 = arith.subf %8, %7 : vector<16x128xf32>
    %cst_3 = arith.constant 2.100000e+01 : f32
    %10 = vector.broadcast %cst_3 : f32 to vector<16x128xf32>
    %11 = arith.mulf %10, %3 : vector<16x128xf32>
    %12 = arith.addf %9, %11 : vector<16x128xf32>
    %13 = arith.mulf %5, %12 : vector<16x128xf32>
    %cst_4 = arith.constant 1.000000e+00 : f32
    %14 = vector.broadcast %cst_4 : f32 to vector<16x128xf32>
    %15 = arith.subf %14, %13 : vector<16x128xf32>
    %cst_5 = arith.constant 5.000000e+00 : f32
    %16 = vector.broadcast %cst_5 : f32 to vector<16x128xf32>
    %17 = arith.cmpf olt, %0, %16 : vector<16x128xf32>
    %cst_6 = arith.constant 0.000000e+00 : f32
    %18 = vector.broadcast %cst_6 : f32 to vector<16x128xf32>
    %19 = arith.select %17, %15, %18 : vector<16x128xi1>, vector<16x128xf32>
    %c0_7 = arith.constant 0 : index
    %c0_8 = arith.constant 0 : index
    %20 = vector.load %arg2[%c0_7, %c0_8] : memref<16x128xf32, #tpu.memory_space<vmem>>, vector<16x128xf32>
    tpu.vector_store %arg2[%c0_7, %c0_8], %19 {strides = array<i32>} : memref<16x128xf32, #tpu.memory_space<vmem>>, vector<16x128xf32>,
    return
  }
  func.func @transform_0(%arg0: i32) -> (i32, i32) {
    %c0_i32 = arith.constant 0 : i32
    %c0_i32_0 = arith.constant 0 : i32
    return %arg0, %c0_i32 : i32, i32
  }
  func.func @transform_1(%arg0: i32) -> (i32, i32) {
    %c0_i32 = arith.constant 0 : i32
    %c0_i32_0 = arith.constant 0 : i32
    return %arg0, %c0_i32 : i32, i32
  }
}

</mosaic_0001>

<llo_original>
// kernel: envelop_layer.1
$region0: #{envelop_layer.1}
  #allocation0 [shape = 'u32[]', space=smem, size = 0x4, offset = 0x4, fixed_abs, tag = 'smem constant byte address 0x4 - core index']
  #allocation1 [shape = 'u32[144,128]{1,0:T(1,128)}', space=vmem, size = 0x12000, scoped, tag = 'internal scratch']
  %s0 = inlined_call_operand.vmem [shape: f32[16,128], index: 0, kind: input, shape index: {}]
  %s1 = inlined_call_operand.vmem [shape: f32[16,128], index: 1, kind: output, shape index: {}]
  %s2 = sld [smem:[#allocation0]]
  $region14: #{envelop_layer.1} parent=0
    _
  %s4 = ssub.s32 1, %s2
  %s5 = scalar_select 0, %s4, %s2
  // Predicated region
  $region2: #{envelop_layer.1} parent=0 // pred_check
    _
  $region3: #{envelop_layer.1} parent=0 // pred_check_branch
    %7 = sbr.rel (0) target = $region5
  $region4: #{envelop_layer.1} parent=0 // pred_region
    _
  $region5: #{envelop_layer.1} parent=0 // pred_fallthru
    _
  %v8 = vld [vmem:[%s0] sm:$0xff]
  %v9 = vld [vmem:[%s0 + $0x8] sm:$0xff]
  %v10 = vmul.f32 %v8, 0.2
  %v11 = vmul.f32 %v9, 0.2
  %v12 = vmul.f32 %v10, %v10
  %v13 = vmul.f32 %v11, %v11
  %v14 = vmul.f32 %v12, %v12
  %v15 = vmul.f32 %v13, %v13
  %v16 = vmul.f32 %v12, %v14
  %v17 = vmul.f32 %v13, %v15
  %v18 = vmul.f32 %v10, 48.0
  %v19 = vmul.f32 %v11, 48.0
  %v20 = vsub.f32 28.0, %v18
  %v21 = vsub.f32 28.0, %v19
  %v22 = vmul.f32 %v12, 21.0
  %v23 = vmul.f32 %v13, 21.0
  %v24 = vadd.f32 %v20, %v22
  %v25 = vadd.f32 %v21, %v23
  %v26 = vmul.f32 %v16, %v24
  %v27 = vmul.f32 %v17, %v25
  %v28 = vsub.f32 1.0, %v26
  %v29 = vsub.f32 1.0, %v27
  %vm30 = vcmp.lt.f32.partialorder %v8, 5.0
  %vm31 = vcmp.lt.f32.partialorder %v9, 5.0
  %v32 = vsel %vm30, %v28, 0.0
  %v33 = vsel %vm31, %v29, 0.0
  %34 = vst [vmem:[%s1] sm:$0xff] %v32
  %35 = vst [vmem:[%s1 + $0x8] sm:$0xff] %v33
  // Predicated region
  $region6: #{envelop_layer.1} parent=0 // pred_check
    _
  $region7: #{envelop_layer.1} parent=0 // pred_check_branch
    %37 = sbr.rel (0) target = $region9
  $region8: #{envelop_layer.1} parent=0 // pred_region
    _
  $region9: #{envelop_layer.1} parent=0 // pred_fallthru
    _
  // Predicated region
  $region10: #{envelop_layer.1} parent=0 // pred_check
    _
  $region11: #{envelop_layer.1} parent=0 // pred_check_branch
    %39 = sbr.rel (0) target = $region13
  $region12: #{envelop_layer.1} parent=0 // pred_region
    _
  $region13: #{envelop_layer.1} parent=0 // pred_fallthru
    _

</llo_original>
